<compile_context>
chip_gen: v6e
topology: v6e:2x2x1
jax: 0.10.0
libtpu: 0.0.40
codegen_flags: <defaults>
</compile_context>

<pallas_src>
import functools

import jax
import jax.numpy as jnp
from jax.experimental import pallas as pl
from jax.experimental.pallas import tpu as pltpu


def _senet_kernel(x_ref, pool_ref, w1t_ref, w2t_ref, expand_ref, o_ref, *, inv_e):
    # x_ref:      (Bt, F*E)  lane-dense tile of the flattened input
    # pool_ref:   (F*E, F)   block-ones pooling matrix (input dtype)
    # w1t_ref:    (F, R)     first excitation weight, transposed (f32)
    # w2t_ref:    (R, F)     second excitation weight, transposed (f32)
    # expand_ref: (F, F*E)   block-ones expansion matrix (f32)
    x2 = x_ref[...]                                                        # (Bt, FE) input dtype

    # Squeeze: per-field mean via a tiny constant matmul on the MXU
    # (keeps the cross-lane reduction off the XLU/VALU); f32 accumulation.
    z = jnp.dot(x2, pool_ref[...], preferred_element_type=jnp.float32) * inv_e      # (Bt, F)

    # Excitation: Linear -> ReLU -> Linear -> ReLU (no bias), in f32.
    h = jnp.maximum(jnp.dot(z, w1t_ref[...], preferred_element_type=jnp.float32), 0.0)   # (Bt, R)
    a = jnp.maximum(jnp.dot(h, w2t_ref[...], preferred_element_type=jnp.float32), 0.0)   # (Bt, F)

    # Fused residual: out = x * (1 + A). The +1 is applied on the small (Bt, F)
    # activation; the broadcast over E is another tiny constant matmul.
    gate = 1.0 + a                                                          # (Bt, F) f32
    scale = jnp.dot(gate, expand_ref[...], preferred_element_type=jnp.float32)    # (Bt, FE)

    # Single vmul per element on the big tensor, in the input dtype (bf16-native
    # on v6e/v7x; f32 on v5e / f32 inputs).
    o_ref[...] = (x2 * scale.astype(x2.dtype)).astype(o_ref.dtype)


def _pick_batch_tile(batch, fe, itemsize, target_tile_bytes=2 << 20):
    """Largest bt that divides `batch`, is a multiple of 8 (or equals batch), and
    keeps one (input or output) tile around ~2 MiB so double-buffered in+out
    stays well inside the scoped-VMEM default on every generation."""
    cap = max(1, target_tile_bytes // max(1, fe * itemsize))
    if batch <= cap:
        return batch
    best = batch  # fall back to grid of 1 if no multiple-of-8 divisor fits
    for bt in range(8, cap + 1, 8):
        if batch % bt == 0:
            best = bt
    return best


def senet_layer(x, w1, w2, *, batch_tile=None):
    """x: (B, F, E); w1: (R, F); w2: (F, R)  (PyTorch nn.Linear weight layout)."""
    B, F, E = x.shape
    R = w1.shape[0]
    assert w1.shape == (R, F) and w2.shape == (F, R)
    FE = F * E
    itemsize = jnp.dtype(x.dtype).itemsize

    bt = _pick_batch_tile(B, FE, itemsize) if batch_tile is None else batch_tile
    assert B % bt == 0, "batch must be divisible by batch_tile"
    assert bt == B or bt % 8 == 0, "batch_tile must be a multiple of 8 (or the full batch)"

    # Lane-dense flatten of (F, E) -> F*E.
    x2d = x.reshape(B, FE)

    # Weights pre-transposed so in-kernel matmuls are plain row-major dots.
    w1t = w1.T.astype(jnp.float32)     # (F, R)
    w2t = w2.T.astype(jnp.float32)     # (R, F)

    # Constant pooling (sum over E per field) and expansion (broadcast over E).
    pool = jnp.kron(jnp.eye(F, dtype=x.dtype), jnp.ones((E, 1), dtype=x.dtype))          # (FE, F)
    expand = jnp.kron(jnp.eye(F, dtype=jnp.float32), jnp.ones((1, E), dtype=jnp.float32))  # (F, FE)

    kernel = functools.partial(_senet_kernel, inv_e=float(1.0 / E))

    # Advisory cost hint: kernel is bandwidth bound (read x + write out).
    flops = 2 * B * FE * F + 4 * B * F * R + 2 * B * F * FE + 2 * B * FE
    bytes_accessed = 2 * B * FE * itemsize + (pool.size + w1t.size + w2t.size + expand.size) * 4

    out2d = pl.pallas_call(
        kernel,
        out_shape=jax.ShapeDtypeStruct((B, FE), x.dtype),
        grid_spec=pltpu.PrefetchScalarGridSpec(
            num_scalar_prefetch=0,
            grid=(B // bt,),
            in_specs=[
                # x streams through the pipeline; weights stay resident
                # (constant index_map) across all grid steps.
                # TODO(synk): optionally sweep pipeline_mode=pl.Buffered(3) on this spec.
                pl.BlockSpec((bt, FE), lambda b: (b, 0)),
                pl.BlockSpec((FE, F), lambda b: (0, 0)),
                pl.BlockSpec((F, R), lambda b: (0, 0)),
                pl.BlockSpec((R, F), lambda b: (0, 0)),
                pl.BlockSpec((F, FE), lambda b: (0, 0)),
            ],
            out_specs=pl.BlockSpec((bt, FE), lambda b: (b, 0)),
        ),
        compiler_params=pltpu.CompilerParams(
            dimension_semantics=("parallel",),
        ),
        cost_estimate=pl.CostEstimate(
            flops=int(flops), transcendentals=0, bytes_accessed=int(bytes_accessed)
        ),
    )(x2d, pool, w1t, w2t, expand)

    return out2d.reshape(B, F, E)


def senet_reference(x, w1, w2):
    z = jnp.mean(x.astype(jnp.float32), axis=-1)
    a = jnp.maximum(z @ w1.T.astype(jnp.float32), 0.0)
    a = jnp.maximum(a @ w2.T.astype(jnp.float32), 0.0)
    v = x.astype(jnp.float32) * a[:, :, None]
    return (x.astype(jnp.float32) + v).astype(x.dtype)


if __name__ == "__main__":
    # Small shapes consistent with the module: (batch, filed_size, embedding_size)
    B, F, E = 2, 8, 16
    reduction_ratio = 3
    R = max(1, F // reduction_ratio)  # reduction_size

    key = jax.random.PRNGKey(0)
    kx, k1, k2 = jax.random.split(key, 3)

    x = jax.random.normal(kx, (B, F, E), dtype=jnp.float32)
    # Deterministic synthetic weights (PyTorch nn.Linear weight layout: (out, in)).
    w1 = jax.random.normal(k1, (R, F), dtype=jnp.float32) * 0.3
    w2 = jax.random.normal(k2, (F, R), dtype=jnp.float32) * 0.3

    out = jax.block_until_ready(senet_layer(x, w1, w2))
    ref = senet_reference(x, w1, w2)
    assert out.shape == (B, F, E)
    assert jnp.allclose(out, ref, atol=1e-4, rtol=1e-4), "mismatch vs reference (f32)"

    # Larger batch: exercises a multi-step grid (software pipelining + megacore split).
    B2 = 64
    x_big = jax.random.normal(jax.random.PRNGKey(1), (B2, F, E), dtype=jnp.float32)
    out_big = jax.block_until_ready(senet_layer(x_big, w1, w2, batch_tile=8))
    ref_big = senet_reference(x_big, w1, w2)
    assert jnp.allclose(out_big, ref_big, atol=1e-4, rtol=1e-4), "mismatch vs reference (tiled)"

    # bf16 input: elementwise tail stays in bf16, mean accumulated in f32.
    x_bf16 = x_big.astype(jnp.bfloat16)
    out_bf16 = jax.block_until_ready(senet_layer(x_bf16, w1, w2, batch_tile=8))
    ref_bf16 = senet_reference(x_bf16, w1, w2)
    assert jnp.allclose(
        out_bf16.astype(jnp.float32), ref_bf16.astype(jnp.float32), atol=5e-2, rtol=5e-2
    ), "mismatch vs reference (bf16)"

    print("KERNEL_OK")
</pallas_src>

<mosaic_0001>
module attributes {stable_mosaic.version = 11 : i64} {
  func.func @_senet_kernel(%arg0: i32, %arg1: memref<2x128xf32, #tpu.memory_space<vmem>>, %arg2: memref<128x8xf32, #tpu.memory_space<vmem>>, %arg3: memref<8x2xf32, #tpu.memory_space<vmem>>, %arg4: memref<2x8xf32, #tpu.memory_space<vmem>>, %arg5: memref<8x128xf32, #tpu.memory_space<vmem>>, %arg6: memref<2x128xf32, #tpu.memory_space<vmem>>) attributes {dimension_semantics = [#tpu.dimension_semantics<parallel>], iteration_bounds = array<i64: 1>, scalar_prefetch = 0 : i64, scratch_operands = 0 : i64, tpu.core_type = #tpu.core_type<tc>, window_params = [{transform_indices = @transform_0, window_bounds = array<i64: 2, 128>}, {pipeline_mode = #tpu.pipeline_mode<synchronous>, transform_indices = @transform_1, window_bounds = array<i64: 128, 8>}, {pipeline_mode = #tpu.pipeline_mode<synchronous>, transform_indices = @transform_2, window_bounds = array<i64: 8, 2>}, {pipeline_mode = #tpu.pipeline_mode<synchronous>, transform_indices = @transform_3, window_bounds = array<i64: 2, 8>}, {pipeline_mode = #tpu.pipeline_mode<synchronous>, transform_indices = @transform_4, window_bounds = array<i64: 8, 128>}, {transform_indices = @transform_5, window_bounds = array<i64: 2, 128>}]} {
    %c0 = arith.constant 0 : index
    %c0_0 = arith.constant 0 : index
    %0 = vector.load %arg1[%c0, %c0_0] : memref<2x128xf32, #tpu.memory_space<vmem>>, vector<2x128xf32>
    %c0_1 = arith.constant 0 : index
    %c0_2 = arith.constant 0 : index
    %1 = vector.load %arg2[%c0_1, %c0_2] : memref<128x8xf32, #tpu.memory_space<vmem>>, vector<128x8xf32>
    %cst = arith.constant dense<0.000000e+00> : vector<2x8xf32>
    %2 = tpu.matmul %0, %1, %cst {dimension_numbers = #tpu.dot_dimension_numbers<[1], [0], [0], [1], [0, 0, 1, 1], [], []>} : vector<2x128xf32>, vector<128x8xf32>, vector<2x8xf32> -> vector<2x8xf32>
    %cst_3 = arith.constant 6.250000e-02 : f32
    %3 = vector.broadcast %cst_3 : f32 to vector<2x8xf32>
    %4 = arith.mulf %2, %3 : vector<2x8xf32>
    %c0_4 = arith.constant 0 : index
    %c0_5 = arith.constant 0 : index
    %5 = vector.load %arg3[%c0_4, %c0_5] : memref<8x2xf32, #tpu.memory_space<vmem>>, vector<8x2xf32>
    %cst_6 = arith.constant dense<0.000000e+00> : vector<2x2xf32>
    %6 = tpu.matmul %4, %5, %cst_6 {dimension_numbers = #tpu.dot_dimension_numbers<[1], [0], [0], [1], [0, 0, 1, 1], [], []>} : vector<2x8xf32>, vector<8x2xf32>, vector<2x2xf32> -> vector<2x2xf32>
    %cst_7 = arith.constant 0.000000e+00 : f32
    %7 = vector.broadcast %cst_7 : f32 to vector<2x2xf32>
    %8 = arith.maximumf %6, %7 : vector<2x2xf32>
    %c0_8 = arith.constant 0 : index
    %c0_9 = arith.constant 0 : index
    %9 = vector.load %arg4[%c0_8, %c0_9] : memref<2x8xf32, #tpu.memory_space<vmem>>, vector<2x8xf32>
    %cst_10 = arith.constant dense<0.000000e+00> : vector<2x8xf32>
    %10 = tpu.matmul %8, %9, %cst_10 {dimension_numbers = #tpu.dot_dimension_numbers<[1], [0], [0], [1], [0, 0, 1, 1], [], []>} : vector<2x2xf32>, vector<2x8xf32>, vector<2x8xf32> -> vector<2x8xf32>
    %cst_11 = arith.constant 0.000000e+00 : f32
    %11 = vector.broadcast %cst_11 : f32 to vector<2x8xf32>
    %12 = arith.maximumf %10, %11 : vector<2x8xf32>
    %cst_12 = arith.constant 1.000000e+00 : f32
    %13 = vector.broadcast %cst_12 : f32 to vector<2x8xf32>
    %14 = arith.addf %13, %12 : vector<2x8xf32>
    %c0_13 = arith.constant 0 : index
    %c0_14 = arith.constant 0 : index
    %15 = vector.load %arg5[%c0_13, %c0_14] : memref<8x128xf32, #tpu.memory_space<vmem>>, vector<8x128xf32>
    %cst_15 = arith.constant dense<0.000000e+00> : vector<2x128xf32>
    %16 = tpu.matmul %14, %15, %cst_15 {dimension_numbers = #tpu.dot_dimension_numbers<[1], [0], [0], [1], [0, 0, 1, 1], [], []>} : vector<2x8xf32>, vector<8x128xf32>, vector<2x128xf32> -> vector<2x128xf32>
    %17 = arith.mulf %0, %16 : vector<2x128xf32>
    %c0_16 = arith.constant 0 : index
    %c0_17 = arith.constant 0 : index
    %18 = vector.load %arg6[%c0_16, %c0_17] : memref<2x128xf32, #tpu.memory_space<vmem>>, vector<2x128xf32>
    tpu.vector_store %arg6[%c0_16, %c0_17], %17 {strides = array<i32>} : memref<2x128xf32, #tpu.memory_space<vmem>>, vector<2x128xf32>,
    return
  }
  func.func @transform_0(%arg0: i32) -> (i32, i32) {
    %c0_i32 = arith.constant 0 : i32
    %c0_i32_0 = arith.constant 0 : i32
    return %arg0, %c0_i32 : i32, i32
  }
  func.func @transform_1(%arg0: i32) -> (i32, i32) {
    %c0_i32 = arith.constant 0 : i32
    %c0_i32_0 = arith.constant 0 : i32
    %c0_i32_1 = arith.constant 0 : i32
    return %c0_i32, %c0_i32_0 : i32, i32
  }
  func.func @transform_2(%arg0: i32) -> (i32, i32) {
    %c0_i32 = arith.constant 0 : i32
    %c0_i32_0 = arith.constant 0 : i32
    %c0_i32_1 = arith.constant 0 : i32
    return %c0_i32, %c0_i32_0 : i32, i32
  }
  func.func @transform_3(%arg0: i32) -> (i32, i32) {
    %c0_i32 = arith.constant 0 : i32
    %c0_i32_0 = arith.constant 0 : i32
    %c0_i32_1 = arith.constant 0 : i32
    return %c0_i32, %c0_i32_0 : i32, i32
  }
  func.func @transform_4(%arg0: i32) -> (i32, i32) {
    %c0_i32 = arith.constant 0 : i32
    %c0_i32_0 = arith.constant 0 : i32
    %c0_i32_1 = arith.constant 0 : i32
    return %c0_i32, %c0_i32_0 : i32, i32
  }
  func.func @transform_5(%arg0: i32) -> (i32, i32) {
    %c0_i32 = arith.constant 0 : i32
    %c0_i32_0 = arith.constant 0 : i32
    return %arg0, %c0_i32 : i32, i32
  }
}

</mosaic_0001>

<llo_original>
// kernel: tpu_custom_call.1
$region0: #{tpu_custom_call.1}
  #allocation0 [shape = 'u32[]', space=smem, size = 0x4, offset = 0x4, fixed_abs, tag = 'smem constant byte address 0x4 - core index']
  #allocation1 [shape = 'u32[144,128]{1,0:T(1,128)}', space=vmem, size = 0x12000, scoped, tag = 'internal scratch']
  %s0 = inlined_call_operand.vmem [shape: f32[2,128], index: 0, kind: input, shape index: {}]
  %s1 = inlined_call_operand.vmem [shape: f32[128,8], index: 1, kind: input, shape index: {}]
  %s2 = inlined_call_operand.vmem [shape: f32[8,2], index: 2, kind: input, shape index: {}]
  %s3 = inlined_call_operand.vmem [shape: f32[2,8], index: 3, kind: input, shape index: {}]
  %s4 = inlined_call_operand.vmem [shape: f32[8,128], index: 4, kind: input, shape index: {}]
  %s5 = inlined_call_operand.hbm [shape: f32[2,128], index: 5, kind: output, shape index: {}]
  %s6 = sld [smem:[#allocation0]]
  $region30: #{tpu_custom_call.1} parent=0
    _
  %s8 = ssub.s32 1, %s6
  %s9 = scalar_select 0, %s8, %s6
  $region1: #{tpu_custom_call.1} parent=0
    #allocation2 [shape = 'u8[1024]{0}', space=vmem, size = 0x400, scoped, tag = 'output window, operand 0, single buffered']
    #allocation3 [shape = 's32[1]{0}', space=sflag, size = 0x4, scoped, tag = 'scoped memory for tpu_custom_call.1']
    %10 = vsyncpa [#allocation3], 0
    // Predicated region
    $region2: #{tpu_custom_call.1} parent=1 // pred_check
      _
    $region3: #{tpu_custom_call.1} parent=1 // pred_check_branch
      %12 = sbr.rel (0) target = $region5
    $region4: #{tpu_custom_call.1} parent=1 // pred_region
      _
    $region5: #{tpu_custom_call.1} parent=1 // pred_fallthru
      _
    // Predicated region
    $region6: #{tpu_custom_call.1} parent=1 // pred_check
      _
    $region7: #{tpu_custom_call.1} parent=1 // pred_check_branch
      %14 = sbr.rel (0) target = $region9
    $region8: #{tpu_custom_call.1} parent=1 // pred_region
      _
    $region9: #{tpu_custom_call.1} parent=1 // pred_fallthru
      _
    // Predicated region
    $region10: #{tpu_custom_call.1} parent=1 // pred_check
      _
    $region11: #{tpu_custom_call.1} parent=1 // pred_check_branch
      %16 = sbr.rel (0) target = $region13
    $region12: #{tpu_custom_call.1} parent=1 // pred_region
      _
    $region13: #{tpu_custom_call.1} parent=1 // pred_fallthru
      _
    // Predicated region
    $region14: #{tpu_custom_call.1} parent=1 // pred_check
      _
    $region15: #{tpu_custom_call.1} parent=1 // pred_check_branch
      %18 = sbr.rel (0) target = $region17
    $region16: #{tpu_custom_call.1} parent=1 // pred_region
      _
    $region17: #{tpu_custom_call.1} parent=1 // pred_fallthru
      _
    // Predicated region
    $region18: #{tpu_custom_call.1} parent=1 // pred_check
      _
    $region19: #{tpu_custom_call.1} parent=1 // pred_check_branch
      %20 = sbr.rel (0) target = $region21
    $region20: #{tpu_custom_call.1} parent=1 // pred_region
      _
    $region21: #{tpu_custom_call.1} parent=1 // pred_fallthru
      _
    %v21 = vld [vmem:[%s0] sm:$0x3]
    %v22 = vld [vmem:[%s1] sm:$0xff]
    %v23 = vld [vmem:[%s1 + $0x8] sm:$0xff]
    %v24 = vld [vmem:[%s1 + $0x10] sm:$0xff]
    %v25 = vld [vmem:[%s1 + $0x18] sm:$0xff]
    %v26 = vld [vmem:[%s1 + $0x20] sm:$0xff]
    %v27 = vld [vmem:[%s1 + $0x28] sm:$0xff]
    %v28 = vld [vmem:[%s1 + $0x30] sm:$0xff]
    %v29 = vld [vmem:[%s1 + $0x38] sm:$0xff]
    %v30 = vld [vmem:[%s1 + $0x40] sm:$0xff]
    %v31 = vld [vmem:[%s1 + $0x48] sm:$0xff]
    %v32 = vld [vmem:[%s1 + $0x50] sm:$0xff]
    %v33 = vld [vmem:[%s1 + $0x58] sm:$0xff]
    %v34 = vld [vmem:[%s1 + $0x60] sm:$0xff]
    %v35 = vld [vmem:[%s1 + $0x68] sm:$0xff]
    %v36 = vld [vmem:[%s1 + $0x70] sm:$0xff]
    %v37 = vld [vmem:[%s1 + $0x78] sm:$0xff]
    %38 = vmatprep.subr.mxu0 0.0
    %39 = vmatpush1.msra.mxu0 %v37
    %40 = vmatprep.subr.mxu0 0.0
    %41 = vmatpush1.msra.mxu0 %v36
    %42 = vmatprep.subr.mxu0 0.0
    %43 = vmatpush1.msra.mxu0 %v35
    %44 = vmatprep.subr.mxu0 0.0
    %45 = vmatpush1.msra.mxu0 %v34
    %46 = vmatprep.subr.mxu0 0.0
    %47 = vmatpush1.msra.mxu0 %v33
    %48 = vmatprep.subr.mxu0 0.0
    %49 = vmatpush1.msra.mxu0 %v32
    %50 = vmatprep.subr.mxu0 0.0
    %51 = vmatpush1.msra.mxu0 %v31
    %52 = vmatprep.subr.mxu0 0.0
    %53 = vmatpush1.msra.mxu0 %v30
    %54 = vmatprep.subr.mxu0 0.0
    %55 = vmatpush1.msra.mxu0 %v29
    %56 = vmatprep.subr.mxu0 0.0
    %57 = vmatpush1.msra.mxu0 %v28
    %58 = vmatprep.subr.mxu0 0.0
    %59 = vmatpush1.msra.mxu0 %v27
    %60 = vmatprep.subr.mxu0 0.0
    %61 = vmatpush1.msra.mxu0 %v26
    %62 = vmatprep.subr.mxu0 0.0
    %63 = vmatpush1.msra.mxu0 %v25
    %64 = vmatprep.subr.mxu0 0.0
    %65 = vmatpush1.msra.mxu0 %v24
    %66 = vmatprep.subr.mxu0 0.0
    %67 = vmatpush1.msra.mxu0 %v23
    %68 = vmatprep.subr.mxu0 0.0
    %69 = vmatpush1.msra.mxu0 %v22
    %70 = vmatprep.subr.mxu0 0.0
    %71 = vmatpush2.msra.mxu0 0.0
    %72 = vmatprep.subr.mxu0 0.0
    %73 = vmatpush2.msra.mxu0 0.0
    %74 = vmatprep.subr.mxu0 0.0
    %75 = vmatpush2.msra.mxu0 0.0
    %76 = vmatprep.subr.mxu0 0.0
    %77 = vmatpush2.msra.mxu0 0.0
    %78 = vmatprep.subr.mxu0 0.0
    %79 = vmatpush2.msra.mxu0 0.0
    %80 = vmatprep.subr.mxu0 0.0
    %81 = vmatpush2.msra.mxu0 0.0
    %82 = vmatprep.subr.mxu0 0.0
    %83 = vmatpush2.msra.mxu0 0.0
    %84 = vmatprep.subr.mxu0 0.0
    %85 = vmatpush2.msra.mxu0 0.0
    %86 = vmatprep.subr.mxu0 0.0
    %87 = vmatpush2.msra.mxu0 0.0
    %88 = vmatprep.subr.mxu0 0.0
    %89 = vmatpush2.msra.mxu0 0.0
    %90 = vmatprep.subr.mxu0 0.0
    %91 = vmatpush2.msra.mxu0 0.0
    %92 = vmatprep.subr.mxu0 0.0
    %93 = vmatpush2.msra.mxu0 0.0
    %94 = vmatprep.subr.mxu0 0.0
    %95 = vmatpush2.msra.mxu0 0.0
    %96 = vmatprep.subr.mxu0 0.0
    %97 = vmatpush2.msra.mxu0 0.0
    %98 = vmatprep.subr.mxu0 0.0
    %99 = vmatpush2.msra.mxu0 0.0
    %100 = vmatprep.subr.mxu0 0.0
    %101 = vmatpush2.msra.mxu0 0.0
    %102 = vmatprep.mubr.f32.mxu0 0.0
    %103 = vmatmul.mubr.f32.gmra.mxu0 %v21
    %v104 = vpop.f32.mrf.mxu0
    %v105 = vadd.f32 0.0, %v104
    %v106 = vpop.f32.mrf.mxu0
    %107 = vdwg.mxu0
    %v108 = vmul.f32 %v105, 0.0625
    %v109 = vld [vmem:[%s2] sm:$0xff]
    %vm110 = vcmask 64512
    %v112 = vsel %vm110, %v108, 0
    %114 = vmatprep.subr.mxu0 0.0
    %115 = vmatpush1.msra.mxu0 0.0
    %116 = vmatprep.subr.mxu0 0.0
    %117 = vmatpush1.msra.mxu0 0.0
    %118 = vmatprep.subr.mxu0 0.0
    %119 = vmatpush1.msra.mxu0 0.0
    %120 = vmatprep.subr.mxu0 0.0
    %121 = vmatpush1.msra.mxu0 0.0
    %122 = vmatprep.subr.mxu0 0.0
    %123 = vmatpush1.msra.mxu0 0.0
    %124 = vmatprep.subr.mxu0 0.0
    %125 = vmatpush1.msra.mxu0 0.0
    %126 = vmatprep.subr.mxu0 0.0
    %127 = vmatpush1.msra.mxu0 0.0
    %128 = vmatprep.subr.mxu0 0.0
    %129 = vmatpush1.msra.mxu0 0.0
    %130 = vmatprep.subr.mxu0 0.0
    %131 = vmatpush1.msra.mxu0 0.0
    %132 = vmatprep.subr.mxu0 0.0
    %133 = vmatpush1.msra.mxu0 0.0
    %134 = vmatprep.subr.mxu0 0.0
    %135 = vmatpush1.msra.mxu0 0.0
    %136 = vmatprep.subr.mxu0 0.0
    %137 = vmatpush1.msra.mxu0 0.0
    %138 = vmatprep.subr.mxu0 0.0
    %139 = vmatpush1.msra.mxu0 0.0
    %140 = vmatprep.subr.mxu0 0.0
    %141 = vmatpush1.msra.mxu0 0.0
    %142 = vmatprep.subr.mxu0 0.0
    %143 = vmatpush1.msra.mxu0 0.0
    %144 = vmatprep.subr.mxu0 0.0
    %145 = vmatpush1.msra.mxu0 %v109
    %146 = vmatprep.subr.mxu0 0.0
    %147 = vmatpush2.msra.mxu0 0.0
    %148 = vmatprep.subr.mxu0 0.0
    %149 = vmatpush2.msra.mxu0 0.0
    %150 = vmatprep.subr.mxu0 0.0
    %151 = vmatpush2.msra.mxu0 0.0
    %152 = vmatprep.subr.mxu0 0.0
    %153 = vmatpush2.msra.mxu0 0.0
    %154 = vmatprep.subr.mxu0 0.0
    %155 = vmatpush2.msra.mxu0 0.0
    %156 = vmatprep.subr.mxu0 0.0
    %157 = vmatpush2.msra.mxu0 0.0
    %158 = vmatprep.subr.mxu0 0.0
    %159 = vmatpush2.msra.mxu0 0.0
    %160 = vmatprep.subr.mxu0 0.0
    %161 = vmatpush2.msra.mxu0 0.0
    %162 = vmatprep.subr.mxu0 0.0
    %163 = vmatpush2.msra.mxu0 0.0
    %164 = vmatprep.subr.mxu0 0.0
    %165 = vmatpush2.msra.mxu0 0.0
    %166 = vmatprep.subr.mxu0 0.0
    %167 = vmatpush2.msra.mxu0 0.0
    %168 = vmatprep.subr.mxu0 0.0
    %169 = vmatpush2.msra.mxu0 0.0
    %170 = vmatprep.subr.mxu0 0.0
    %171 = vmatpush2.msra.mxu0 0.0
    %172 = vmatprep.subr.mxu0 0.0
    %173 = vmatpush2.msra.mxu0 0.0
    %174 = vmatprep.subr.mxu0 0.0
    %175 = vmatpush2.msra.mxu0 0.0
    %176 = vmatprep.subr.mxu0 0.0
    %177 = vmatpush2.msra.mxu0 0.0
    %178 = vmatprep.mubr.f32.mxu0 0.0
    %179 = vmatmul.mubr.f32.gmra.mxu0 %v112
    %v180 = vpop.f32.mrf.mxu0
    %v181 = vadd.f32 0.0, %v180
    %v182 = vpop.f32.mrf.mxu0
    %183 = vdwg.mxu0
    %v184 = vmax.f32 %v181, 0.0
    %v185 = vld [vmem:[%s3] sm:$0x3]
    %vm186 = vcmask 15360
    %v188 = vsel %vm186, %v184, 0
    %vm190 = vcmask 1041408
    %v192 = vsel %vm190, %v185, 0
    %194 = vmatprep.subr.mxu0 0.0
    %195 = vmatpush1.msra.mxu0 0.0
    %196 = vmatprep.subr.mxu0 0.0
    %197 = vmatpush1.msra.mxu0 0.0
    %198 = vmatprep.subr.mxu0 0.0
    %199 = vmatpush1.msra.mxu0 0.0
    %200 = vmatprep.subr.mxu0 0.0
    %201 = vmatpush1.msra.mxu0 0.0
    %202 = vmatprep.subr.mxu0 0.0
    %203 = vmatpush1.msra.mxu0 0.0
    %204 = vmatprep.subr.mxu0 0.0
    %205 = vmatpush1.msra.mxu0 0.0
    %206 = vmatprep.subr.mxu0 0.0
    %207 = vmatpush1.msra.mxu0 0.0
    %208 = vmatprep.subr.mxu0 0.0
    %209 = vmatpush1.msra.mxu0 0.0
    %210 = vmatprep.subr.mxu0 0.0
    %211 = vmatpush1.msra.mxu0 0.0
    %212 = vmatprep.subr.mxu0 0.0
    %213 = vmatpush1.msra.mxu0 0.0
    %214 = vmatprep.subr.mxu0 0.0
    %215 = vmatpush1.msra.mxu0 0.0
    %216 = vmatprep.subr.mxu0 0.0
    %217 = vmatpush1.msra.mxu0 0.0
    %218 = vmatprep.subr.mxu0 0.0
    %219 = vmatpush1.msra.mxu0 0.0
    %220 = vmatprep.subr.mxu0 0.0
    %221 = vmatpush1.msra.mxu0 0.0
    %222 = vmatprep.subr.mxu0 0.0
    %223 = vmatpush1.msra.mxu0 0.0
    %224 = vmatprep.subr.mxu0 0.0
    %225 = vmatpush1.msra.mxu0 %v192
    %226 = vmatprep.subr.mxu0 0.0
    %227 = vmatpush2.msra.mxu0 0.0
    %228 = vmatprep.subr.mxu0 0.0
    %229 = vmatpush2.msra.mxu0 0.0
    %230 = vmatprep.subr.mxu0 0.0
    %231 = vmatpush2.msra.mxu0 0.0
    %232 = vmatprep.subr.mxu0 0.0
    %233 = vmatpush2.msra.mxu0 0.0
    %234 = vmatprep.subr.mxu0 0.0
    %235 = vmatpush2.msra.mxu0 0.0
    %236 = vmatprep.subr.mxu0 0.0
    %237 = vmatpush2.msra.mxu0 0.0
    %238 = vmatprep.subr.mxu0 0.0
    %239 = vmatpush2.msra.mxu0 0.0
    %240 = vmatprep.subr.mxu0 0.0
    %241 = vmatpush2.msra.mxu0 0.0
    %242 = vmatprep.subr.mxu0 0.0
    %243 = vmatpush2.msra.mxu0 0.0
    %244 = vmatprep.subr.mxu0 0.0
    %245 = vmatpush2.msra.mxu0 0.0
    %246 = vmatprep.subr.mxu0 0.0
    %247 = vmatpush2.msra.mxu0 0.0
    %248 = vmatprep.subr.mxu0 0.0
    %249 = vmatpush2.msra.mxu0 0.0
    %250 = vmatprep.subr.mxu0 0.0
    %251 = vmatpush2.msra.mxu0 0.0
    %252 = vmatprep.subr.mxu0 0.0
    %253 = vmatpush2.msra.mxu0 0.0
    %254 = vmatprep.subr.mxu0 0.0
    %255 = vmatpush2.msra.mxu0 0.0
    %256 = vmatprep.subr.mxu0 0.0
    %257 = vmatpush2.msra.mxu0 0.0
    %258 = vmatprep.mubr.f32.mxu0 0.0
    %259 = vmatmul.mubr.f32.gmra.mxu0 %v188
    %v260 = vpop.f32.mrf.mxu0
    %v261 = vadd.f32 0.0, %v260
    %v262 = vpop.f32.mrf.mxu0
    %263 = vdwg.mxu0
    %v264 = vmax.f32 %v261, 0.0
    %v265 = vadd.f32 %v264, 1.0
    %v266 = vld [vmem:[%s4] sm:$0xff]
    %v268 = vsel %vm110, %v265, 0
    %270 = vmatprep.subr.mxu0 0.0
    %271 = vmatpush1.msra.mxu0 0.0
    %272 = vmatprep.subr.mxu0 0.0
    %273 = vmatpush1.msra.mxu0 0.0
    %274 = vmatprep.subr.mxu0 0.0
    %275 = vmatpush1.msra.mxu0 0.0
    %276 = vmatprep.subr.mxu0 0.0
    %277 = vmatpush1.msra.mxu0 0.0
    %278 = vmatprep.subr.mxu0 0.0
    %279 = vmatpush1.msra.mxu0 0.0
    %280 = vmatprep.subr.mxu0 0.0
    %281 = vmatpush1.msra.mxu0 0.0
    %282 = vmatprep.subr.mxu0 0.0
    %283 = vmatpush1.msra.mxu0 0.0
    %284 = vmatprep.subr.mxu0 0.0
    %285 = vmatpush1.msra.mxu0 0.0
    %286 = vmatprep.subr.mxu0 0.0
    %287 = vmatpush1.msra.mxu0 0.0
    %288 = vmatprep.subr.mxu0 0.0
    %289 = vmatpush1.msra.mxu0 0.0
    %290 = vmatprep.subr.mxu0 0.0
    %291 = vmatpush1.msra.mxu0 0.0
    %292 = vmatprep.subr.mxu0 0.0
    %293 = vmatpush1.msra.mxu0 0.0
    %294 = vmatprep.subr.mxu0 0.0
    %295 = vmatpush1.msra.mxu0 0.0
    %296 = vmatprep.subr.mxu0 0.0
    %297 = vmatpush1.msra.mxu0 0.0
    %298 = vmatprep.subr.mxu0 0.0
    %299 = vmatpush1.msra.mxu0 0.0
    %300 = vmatprep.subr.mxu0 0.0
    %301 = vmatpush1.msra.mxu0 %v266
    %302 = vmatprep.subr.mxu0 0.0
    %303 = vmatpush2.msra.mxu0 0.0
    %304 = vmatprep.subr.mxu0 0.0
    %305 = vmatpush2.msra.mxu0 0.0
    %306 = vmatprep.subr.mxu0 0.0
    %307 = vmatpush2.msra.mxu0 0.0
    %308 = vmatprep.subr.mxu0 0.0
    %309 = vmatpush2.msra.mxu0 0.0
    %310 = vmatprep.subr.mxu0 0.0
    %311 = vmatpush2.msra.mxu0 0.0
    %312 = vmatprep.subr.mxu0 0.0
    %313 = vmatpush2.msra.mxu0 0.0
    %314 = vmatprep.subr.mxu0 0.0
    %315 = vmatpush2.msra.mxu0 0.0
    %316 = vmatprep.subr.mxu0 0.0
    %317 = vmatpush2.msra.mxu0 0.0
    %318 = vmatprep.subr.mxu0 0.0
    %319 = vmatpush2.msra.mxu0 0.0
    %320 = vmatprep.subr.mxu0 0.0
    %321 = vmatpush2.msra.mxu0 0.0
    %322 = vmatprep.subr.mxu0 0.0
    %323 = vmatpush2.msra.mxu0 0.0
    %324 = vmatprep.subr.mxu0 0.0
    %325 = vmatpush2.msra.mxu0 0.0
    %326 = vmatprep.subr.mxu0 0.0
    %327 = vmatpush2.msra.mxu0 0.0
    %328 = vmatprep.subr.mxu0 0.0
    %329 = vmatpush2.msra.mxu0 0.0
    %330 = vmatprep.subr.mxu0 0.0
    %331 = vmatpush2.msra.mxu0 0.0
    %332 = vmatprep.subr.mxu0 0.0
    %333 = vmatpush2.msra.mxu0 0.0
    %334 = vmatprep.mubr.f32.mxu0 0.0
    %335 = vmatmul.mubr.f32.gmra.mxu0 %v268
    %v336 = vpop.f32.mrf.mxu0
    %v337 = vadd.f32 0.0, %v336
    %v338 = vpop.f32.mrf.mxu0
    %339 = vdwg.mxu0
    %v340 = vmul.f32 %v21, %v337
    %341 = vst [vmem:[#allocation2] sm:$0x3] %v340
    // Predicated region
    $region22: #{tpu_custom_call.1} parent=1 // pred_check
      _
    $region23: #{tpu_custom_call.1} parent=1 // pred_check_branch
      %343 = sbr.rel (0) target = $region25
    $region24: #{tpu_custom_call.1} parent=1 // pred_region
      %s345 = ssub.s32 32, 32
      %346 = vsyncadd [#allocation3], %s345
      %s348 = sshll.u32 [#allocation2], 4
      %s349 = int_to_ptr.vmem [resolvable:$true] %s348
      %351 = dma.vmem_to_hbm [thread:$0]  %s349, 32, %s5, [#allocation3]
    $region25: #{tpu_custom_call.1} parent=1 // pred_fallthru
      _
    // Predicated region
    $region26: #{tpu_custom_call.1} parent=1 // pred_check
      _
    $region27: #{tpu_custom_call.1} parent=1 // pred_check_branch
      %353 = sbr.rel (0) target = $region29
    $region28: #{tpu_custom_call.1} parent=1 // pred_region
      %354 = dma.done [#allocation3], 32
    $region29: #{tpu_custom_call.1} parent=1 // pred_fallthru
      _
    %355 = vsyncpa [#allocation3], 1

</llo_original>
